<compile_context>
chip_gen: v6e
topology: v6e:2x2x1
jax: 0.10.0
libtpu: 0.0.40
codegen_flags: <defaults>
</compile_context>

<pallas_src>
import functools

import jax
import jax.numpy as jnp
import numpy as np
from jax.experimental import pallas as pl
from jax.experimental.pallas import tpu as pltpu


def _combine_attn_kernel(x_ref, enc_ref, wx_ref, wae_ref, ba_ref, vblk_ref,
                         wlw_ref, bl_ref, out_ref, attn_ref, *, w_size):
    # x_ref:    (tS, 2F)       bf16 hidden tile
    # enc_ref:  (S + 2w, F)    bf16 zero-padded encoder outputs (resident per batch element)
    # wx_ref:   (2F, 2F)       [W_attn_h | W_lin_x]
    # wae_ref:  (F, F)         W_attn_e
    # vblk_ref: (W*F, 128)     block-diagonal v (column k holds v over rows k*F:(k+1)*F)
    # wlw_ref:  (F, F)         W_lin_w
    # out_ref:  (tS, F)        f32 sigmoid(linear(...))
    # attn_ref: (tS, 128)      f32 softmax attention, lanes >= W are zero
    W = 2 * w_size + 1
    tS, F = out_ref.shape

    i = pl.program_id(1)
    base = pl.multiple_of(i * tS, tS)

    x = x_ref[...]                                              # (tS, 2F)
    enc_halo = enc_ref[pl.ds(base, tS + 2 * w_size), :]         # (tS + 2w, F)

    # Fused x-side projections: one MXU pass gives both the attention-hidden part and
    # the x part of the final linear.
    xp = jnp.dot(x, wx_ref[...], preferred_element_type=jnp.float32)        # (tS, 2F)
    hid_proj = xp[:, :F] + ba_ref[...]                                      # (tS, F)
    x_lin = xp[:, F:]                                                       # (tS, F)

    # Hoisted encoder projection over the halo window (once, not once per offset).
    enc_proj = jnp.dot(enc_halo, wae_ref[...],
                       preferred_element_type=jnp.float32)                  # (tS + 2w, F)

    # Energies for all W window offsets, lane-concatenated; a single MXU dot against the
    # block-diagonal v matrix yields lane-dense scores (no N=1 matmuls, no 1-lane concats).
    e_cat = jnp.concatenate(
        [jnp.tanh(hid_proj + enc_proj[k:k + tS]) for k in range(W)], axis=-1)  # (tS, W*F)
    scores = jnp.dot(e_cat.astype(jnp.bfloat16), vblk_ref[...],
                     preferred_element_type=jnp.float32)                     # (tS, 128)

    lane = jax.lax.broadcasted_iota(jnp.int32, scores.shape, 1)
    scores = jnp.where(lane < W, scores, -jnp.inf)
    m = jnp.max(scores, axis=-1, keepdims=True)
    p = jnp.exp(scores - m)                                                  # masked lanes -> 0
    a = p * pl.reciprocal(jnp.sum(p, axis=-1, keepdims=True), approx=True)   # (tS, 128)
    attn_ref[...] = a                                                        # lane-dense store

    # Weighted context: re-slice the halo per offset (no stored window list).
    # TODO(synk): for large W this could become a single MXU band-matmul via a strided roll.
    weighted = jnp.zeros((tS, F), jnp.float32)
    for k in range(W):
        weighted = weighted + a[:, k:k + 1] * enc_halo[k:k + tS].astype(jnp.float32)

    y = (x_lin
         + jnp.dot(weighted.astype(jnp.bfloat16), wlw_ref[...],
                   preferred_element_type=jnp.float32)
         + bl_ref[...])
    out_ref[...] = jax.nn.sigmoid(y).astype(out_ref.dtype)


def combine_stack_with_attn(x, encoder_outputs, params, w_size):
    B, S, H = x.shape                      # H = 2F
    F_ = encoder_outputs.shape[-1]
    assert H == 2 * F_
    W = 2 * w_size + 1
    Sp = S + 2 * w_size
    LANE = ((W + 127) // 128) * 128        # lane-dense attention output width

    # Sequence tiling (tS must be a multiple of 8 or the full S).
    if S <= 256:
        tS = S
    else:
        tS = next((t for t in (256, 128, 64, 32, 16, 8) if S % t == 0), S)
    nS = S // tS

    bf16 = jnp.bfloat16
    wah, wae, ba, v, wlx, wlw, bl = (params[k] for k in
        ("w_attn_h", "w_attn_e", "b_attn", "v", "w_lin_x", "w_lin_w", "b_lin"))

    # Fused x-side weight and bf16 operand casts (accumulation stays f32 in-kernel).
    wx = jnp.concatenate([wah, wlx], axis=1).astype(bf16)                    # (2F, 2F)
    wae_b = wae.astype(bf16)
    wlw_b = wlw.astype(bf16)
    ba_f = ba.reshape(1, F_).astype(jnp.float32)
    bl_f = bl.reshape(1, F_).astype(jnp.float32)

    # Block-diagonal v: column k holds v over rows [k*F, (k+1)*F); lanes >= W are zero.
    eye_wl = jnp.eye(W, LANE, dtype=jnp.float32)
    v_blk = (v[:, 0][None, :, None] * eye_wl[:, None, :]).reshape(W * F_, LANE).astype(bf16)

    # TODO(synk): the halo could instead be fetched in-kernel from the unpadded encoder
    # (saves one (B, Sp, F) HBM round trip); kept as an XLA pad for robustness.
    enc_pad = jnp.pad(encoder_outputs, ((0, 0), (w_size, w_size), (0, 0))).astype(bf16)
    x_b = x.astype(bf16)

    kernel = functools.partial(_combine_attn_kernel, w_size=w_size)
    full2d = lambda arr: pl.BlockSpec(arr.shape, lambda b, i: (0, 0))

    out, attn = pl.pallas_call(
        kernel,
        out_shape=(jax.ShapeDtypeStruct((B, S, F_), jnp.float32),
                   jax.ShapeDtypeStruct((B, S, LANE), jnp.float32)),
        grid=(B, nS),
        in_specs=[
            pl.BlockSpec((None, tS, H), lambda b, i: (b, i, 0)),     # x tile
            pl.BlockSpec((None, Sp, F_), lambda b, i: (b, 0, 0)),    # padded enc, resident per b
            full2d(wx), full2d(wae_b), full2d(ba_f), full2d(v_blk),
            full2d(wlw_b), full2d(bl_f),
        ],
        out_specs=(pl.BlockSpec((None, tS, F_), lambda b, i: (b, i, 0)),
                   pl.BlockSpec((None, tS, LANE), lambda b, i: (b, i, 0))),
        compiler_params=pltpu.CompilerParams(
            dimension_semantics=("parallel", "parallel"),
            vmem_limit_bytes=32 * 1024 * 1024),
    )(x_b, enc_pad, wx, wae_b, ba_f, v_blk, wlw_b, bl_f)

    return out, attn[..., :W].reshape(B, S, 1, W)


def reference(x, encoder_outputs, params, w_size):
    """Pure-JAX f32 reference mirroring the PyTorch forward."""
    B, S, F_ = encoder_outputs.shape
    W = 2 * w_size + 1
    enc_pad = jnp.pad(encoder_outputs, ((0, 0), (w_size, w_size), (0, 0)))
    idx = jnp.arange(S)[:, None] + jnp.arange(W)[None, :]
    win = enc_pad[:, idx, :]                                          # (B, S, W, F)
    hid = jnp.broadcast_to(x[:, :, None, :], (B, S, W, x.shape[-1]))  # (B, S, W, 2F)
    cat = jnp.concatenate([hid, win], axis=-1)                        # (B, S, W, 3F)
    w_attn = jnp.concatenate([params["w_attn_h"], params["w_attn_e"]], axis=0)
    energy = jnp.tanh(cat @ w_attn + params["b_attn"][0])
    score = (energy @ params["v"])[..., 0]                            # (B, S, W)
    a = jax.nn.softmax(score, axis=-1)
    weighted = jnp.einsum('bsw,bswf->bsf', a, win)
    w_lin = jnp.concatenate([params["w_lin_x"], params["w_lin_w"]], axis=0)
    y = jnp.concatenate([x, weighted], axis=-1) @ w_lin + params["b_lin"][0]
    return jax.nn.sigmoid(y), a[:, :, None, :]


if __name__ == "__main__":
    key = jax.random.PRNGKey(0)
    B, S, F_, w_size = 2, 8, 16, 2        # output_features = 16, window = 5
    H = 2 * F_                            # hidden = model_size = 2 * output_features
    ks = jax.random.split(key, 10)

    x = jax.random.normal(ks[0], (B, S, H), jnp.float32)
    enc = jax.random.normal(ks[1], (B, S, F_), jnp.float32)

    def init(k, shape, fan_in):           # PyTorch-Linear-style uniform init
        bound = 1.0 / np.sqrt(fan_in)
        return jax.random.uniform(k, shape, jnp.float32, -bound, bound)

    in_attn = H + F_                      # 3F: input dim of both Linear layers
    params = {
        "w_attn_h": init(ks[2], (H, F_), in_attn),
        "w_attn_e": init(ks[3], (F_, F_), in_attn),
        "b_attn":   init(ks[4], (1, F_), in_attn),
        "v":        init(ks[5], (F_, 1), F_),
        "w_lin_x":  init(ks[6], (H, F_), in_attn),
        "w_lin_w":  init(ks[7], (F_, F_), in_attn),
        "b_lin":    init(ks[8], (1, F_), in_attn),
    }

    out, a = combine_stack_with_attn(x, enc, params, w_size)
    jax.block_until_ready((out, a))

    ref_out, ref_a = reference(x, enc, params, w_size)
    # bf16 MXU operands (f32 accumulation) => looser tolerance than pure-f32.
    assert np.allclose(np.asarray(out), np.asarray(ref_out), atol=2e-2, rtol=2e-2)
    assert np.allclose(np.asarray(a), np.asarray(ref_a), atol=2e-2, rtol=2e-2)
    print("KERNEL_OK")
</pallas_src>

<mosaic_0001>
module attributes {stable_mosaic.version = 11 : i64} {
  func.func @_combine_attn_kernel(%arg0: i32, %arg1: i32, %arg2: memref<1x8x32xbf16, #tpu.memory_space<vmem>>, %arg3: memref<1x12x16xbf16, #tpu.memory_space<vmem>>, %arg4: memref<32x32xbf16, #tpu.memory_space<vmem>>, %arg5: memref<16x16xbf16, #tpu.memory_space<vmem>>, %arg6: memref<1x16xf32, #tpu.memory_space<vmem>>, %arg7: memref<80x128xbf16, #tpu.memory_space<vmem>>, %arg8: memref<16x16xbf16, #tpu.memory_space<vmem>>, %arg9: memref<1x16xf32, #tpu.memory_space<vmem>>, %arg10: memref<1x8x16xf32, #tpu.memory_space<vmem>>, %arg11: memref<1x8x128xf32, #tpu.memory_space<vmem>>) attributes {dimension_semantics = [#tpu.dimension_semantics<parallel>, #tpu.dimension_semantics<parallel>], iteration_bounds = array<i64: 2, 1>, scalar_prefetch = 0 : i64, scratch_operands = 0 : i64, tpu.core_type = #tpu.core_type<tc>, window_params = [{transform_indices = @transform_0, window_bounds = array<i64: 1, 8, 32>}, {transform_indices = @transform_1, window_bounds = array<i64: 1, 12, 16>}, {pipeline_mode = #tpu.pipeline_mode<synchronous>, transform_indices = @transform_2, window_bounds = array<i64: 32, 32>}, {pipeline_mode = #tpu.pipeline_mode<synchronous>, transform_indices = @transform_3, window_bounds = array<i64: 16, 16>}, {pipeline_mode = #tpu.pipeline_mode<synchronous>, transform_indices = @transform_4, window_bounds = array<i64: 1, 16>}, {pipeline_mode = #tpu.pipeline_mode<synchronous>, transform_indices = @transform_5, window_bounds = array<i64: 80, 128>}, {pipeline_mode = #tpu.pipeline_mode<synchronous>, transform_indices = @transform_6, window_bounds = array<i64: 16, 16>}, {pipeline_mode = #tpu.pipeline_mode<synchronous>, transform_indices = @transform_7, window_bounds = array<i64: 1, 16>}, {transform_indices = @transform_8, window_bounds = array<i64: 1, 8, 16>}, {transform_indices = @transform_9, window_bounds = array<i64: 1, 8, 128>}]} {
    %c8_i32 = arith.constant 8 : i32
    %0 = arith.muli %arg1, %c8_i32 : i32
    %1 = tpu.assume_multiple %0, 8 : i32
    %c0 = arith.constant 0 : index
    %c0_0 = arith.constant 0 : index
    %c0_1 = arith.constant 0 : index
    %2 = vector.load %arg2[%c0, %c0_0, %c0_1] : memref<1x8x32xbf16, #tpu.memory_space<vmem>>, vector<1x8x32xbf16>
    %3 = vector.shape_cast %2 : vector<1x8x32xbf16> to vector<8x32xbf16>
    %c0_2 = arith.constant 0 : index
    %4 = arith.index_cast %1 : i32 to index
    %c0_3 = arith.constant 0 : index
    %5 = vector.load %arg3[%c0_2, %4, %c0_3] : memref<1x12x16xbf16, #tpu.memory_space<vmem>>, vector<1x12x16xbf16>
    %6 = vector.shape_cast %5 : vector<1x12x16xbf16> to vector<12x16xbf16>
    %c0_4 = arith.constant 0 : index
    %c0_5 = arith.constant 0 : index
    %7 = vector.load %arg4[%c0_4, %c0_5] : memref<32x32xbf16, #tpu.memory_space<vmem>>, vector<32x32xbf16>
    %cst = arith.constant dense<0.000000e+00> : vector<8x32xf32>
    %8 = tpu.matmul %3, %7, %cst {dimension_numbers = #tpu.dot_dimension_numbers<[1], [0], [0], [1], [0, 0, 1, 1], [], []>} : vector<8x32xbf16>, vector<32x32xbf16>, vector<8x32xf32> -> vector<8x32xf32>
    %9 = vector.extract_strided_slice %8 {offsets = [0, 0], sizes = [8, 16], strides = [1, 1]} : vector<8x32xf32> to vector<8x16xf32>
    %c0_6 = arith.constant 0 : index
    %c0_7 = arith.constant 0 : index
    %10 = vector.load %arg6[%c0_6, %c0_7] : memref<1x16xf32, #tpu.memory_space<vmem>>, vector<1x16xf32>
    %11 = vector.broadcast %10 : vector<1x16xf32> to vector<8x16xf32>
    %12 = arith.addf %9, %11 : vector<8x16xf32>
    %13 = vector.extract_strided_slice %8 {offsets = [0, 16], sizes = [8, 16], strides = [1, 1]} : vector<8x32xf32> to vector<8x16xf32>
    %c0_8 = arith.constant 0 : index
    %c0_9 = arith.constant 0 : index
    %14 = vector.load %arg5[%c0_8, %c0_9] : memref<16x16xbf16, #tpu.memory_space<vmem>>, vector<16x16xbf16>
    %cst_10 = arith.constant dense<0.000000e+00> : vector<12x16xf32>
    %15 = tpu.matmul %6, %14, %cst_10 {dimension_numbers = #tpu.dot_dimension_numbers<[1], [0], [0], [1], [0, 0, 1, 1], [], []>} : vector<12x16xbf16>, vector<16x16xbf16>, vector<12x16xf32> -> vector<12x16xf32>
    %16 = vector.extract_strided_slice %15 {offsets = [0, 0], sizes = [8, 16], strides = [1, 1]} : vector<12x16xf32> to vector<8x16xf32>
    %17 = arith.addf %12, %16 : vector<8x16xf32>
    %18 = math.tanh %17 : vector<8x16xf32>
    %19 = vector.extract_strided_slice %15 {offsets = [1, 0], sizes = [8, 16], strides = [1, 1]} : vector<12x16xf32> to vector<8x16xf32>
    %20 = arith.addf %12, %19 : vector<8x16xf32>
    %21 = math.tanh %20 : vector<8x16xf32>
    %22 = vector.extract_strided_slice %15 {offsets = [2, 0], sizes = [8, 16], strides = [1, 1]} : vector<12x16xf32> to vector<8x16xf32>
    %23 = arith.addf %12, %22 : vector<8x16xf32>
    %24 = math.tanh %23 : vector<8x16xf32>
    %25 = vector.extract_strided_slice %15 {offsets = [3, 0], sizes = [8, 16], strides = [1, 1]} : vector<12x16xf32> to vector<8x16xf32>
    %26 = arith.addf %12, %25 : vector<8x16xf32>
    %27 = math.tanh %26 : vector<8x16xf32>
    %28 = vector.extract_strided_slice %15 {offsets = [4, 0], sizes = [8, 16], strides = [1, 1]} : vector<12x16xf32> to vector<8x16xf32>
    %29 = arith.addf %12, %28 : vector<8x16xf32>
    %30 = math.tanh %29 : vector<8x16xf32>
    %31 = tpu.concatenate %18, %21, %24, %27, %30 in 1 : vector<8x16xf32>, vector<8x16xf32>, vector<8x16xf32>, vector<8x16xf32>, vector<8x16xf32> -> vector<8x80xf32>
    %32 = arith.truncf %31 : vector<8x80xf32> to vector<8x80xbf16>
    %c0_11 = arith.constant 0 : index
    %c0_12 = arith.constant 0 : index
    %33 = vector.load %arg7[%c0_11, %c0_12] : memref<80x128xbf16, #tpu.memory_space<vmem>>, vector<80x128xbf16>
    %cst_13 = arith.constant dense<0.000000e+00> : vector<8x128xf32>
    %34 = tpu.matmul %32, %33, %cst_13 {dimension_numbers = #tpu.dot_dimension_numbers<[1], [0], [0], [1], [0, 0, 1, 1], [], []>} : vector<8x80xbf16>, vector<80x128xbf16>, vector<8x128xf32> -> vector<8x128xf32>
    %35 = tpu.iota {dimensions = array<i32: 1>} : vector<8x128xi32>
    %c5_i32 = arith.constant 5 : i32
    %36 = vector.broadcast %c5_i32 : i32 to vector<8x128xi32>
    %37 = arith.cmpi slt, %35, %36 : vector<8x128xi32>
    %cst_14 = arith.constant 0xFF800000 : f32
    %38 = vector.broadcast %cst_14 : f32 to vector<8x128xf32>
    %39 = arith.select %37, %34, %38 : vector<8x128xi1>, vector<8x128xf32>
    %cst_15 = arith.constant dense<0xFF800000> : vector<8xf32>
    %40 = vector.multi_reduction <maximumf>, %39, %cst_15 [1] : vector<8x128xf32> to vector<8xf32>
    %41 = vector.shape_cast %40 : vector<8xf32> to vector<8x1xf32>
    %42 = vector.broadcast %41 : vector<8x1xf32> to vector<8x128xf32>
    %43 = arith.subf %39, %42 : vector<8x128xf32>
    %44 = math.exp %43 : vector<8x128xf32>
    %cst_16 = arith.constant dense<0.000000e+00> : vector<8xf32>
    %45 = vector.multi_reduction <add>, %44, %cst_16 [1] : vector<8x128xf32> to vector<8xf32>
    %46 = vector.shape_cast %45 : vector<8xf32> to vector<8x1xf32>
    %47 = tpu.reciprocal %46 {approx = true} : vector<8x1xf32> -> vector<8x1xf32>
    %48 = vector.broadcast %47 : vector<8x1xf32> to vector<8x128xf32>
    %49 = arith.mulf %44, %48 : vector<8x128xf32>
    %c0_17 = arith.constant 0 : index
    %c0_18 = arith.constant 0 : index
    %c0_19 = arith.constant 0 : index
    %50 = vector.load %arg11[%c0_17, %c0_18, %c0_19] : memref<1x8x128xf32, #tpu.memory_space<vmem>>, vector<1x8x128xf32>
    %51 = vector.shape_cast %50 : vector<1x8x128xf32> to vector<8x128xf32>
    %52 = vector.shape_cast %49 : vector<8x128xf32> to vector<1x8x128xf32>
    tpu.vector_store %arg11[%c0_17, %c0_18, %c0_19], %52 {strides = array<i32>} : memref<1x8x128xf32, #tpu.memory_space<vmem>>, vector<1x8x128xf32>,
    %cst_20 = arith.constant 0.000000e+00 : f32
    %53 = vector.broadcast %cst_20 : f32 to vector<8x16xf32>
    %54 = vector.extract_strided_slice %49 {offsets = [0, 0], sizes = [8, 1], strides = [1, 1]} : vector<8x128xf32> to vector<8x1xf32>
    %55 = vector.extract_strided_slice %6 {offsets = [0, 0], sizes = [8, 16], strides = [1, 1]} : vector<12x16xbf16> to vector<8x16xbf16>
    %56 = arith.extf %55 : vector<8x16xbf16> to vector<8x16xf32>
    %57 = vector.broadcast %54 : vector<8x1xf32> to vector<8x16xf32>
    %58 = arith.mulf %57, %56 : vector<8x16xf32>
    %59 = arith.addf %53, %58 : vector<8x16xf32>
    %60 = vector.extract_strided_slice %49 {offsets = [0, 1], sizes = [8, 1], strides = [1, 1]} : vector<8x128xf32> to vector<8x1xf32>
    %61 = vector.extract_strided_slice %6 {offsets = [1, 0], sizes = [8, 16], strides = [1, 1]} : vector<12x16xbf16> to vector<8x16xbf16>
    %62 = arith.extf %61 : vector<8x16xbf16> to vector<8x16xf32>
    %63 = vector.broadcast %60 : vector<8x1xf32> to vector<8x16xf32>
    %64 = arith.mulf %63, %62 : vector<8x16xf32>
    %65 = arith.addf %59, %64 : vector<8x16xf32>
    %66 = vector.extract_strided_slice %49 {offsets = [0, 2], sizes = [8, 1], strides = [1, 1]} : vector<8x128xf32> to vector<8x1xf32>
    %67 = vector.extract_strided_slice %6 {offsets = [2, 0], sizes = [8, 16], strides = [1, 1]} : vector<12x16xbf16> to vector<8x16xbf16>
    %68 = arith.extf %67 : vector<8x16xbf16> to vector<8x16xf32>
    %69 = vector.broadcast %66 : vector<8x1xf32> to vector<8x16xf32>
    %70 = arith.mulf %69, %68 : vector<8x16xf32>
    %71 = arith.addf %65, %70 : vector<8x16xf32>
    %72 = vector.extract_strided_slice %49 {offsets = [0, 3], sizes = [8, 1], strides = [1, 1]} : vector<8x128xf32> to vector<8x1xf32>
    %73 = vector.extract_strided_slice %6 {offsets = [3, 0], sizes = [8, 16], strides = [1, 1]} : vector<12x16xbf16> to vector<8x16xbf16>
    %74 = arith.extf %73 : vector<8x16xbf16> to vector<8x16xf32>
    %75 = vector.broadcast %72 : vector<8x1xf32> to vector<8x16xf32>
    %76 = arith.mulf %75, %74 : vector<8x16xf32>
    %77 = arith.addf %71, %76 : vector<8x16xf32>
    %78 = vector.extract_strided_slice %49 {offsets = [0, 4], sizes = [8, 1], strides = [1, 1]} : vector<8x128xf32> to vector<8x1xf32>
    %79 = vector.extract_strided_slice %6 {offsets = [4, 0], sizes = [8, 16], strides = [1, 1]} : vector<12x16xbf16> to vector<8x16xbf16>
    %80 = arith.extf %79 : vector<8x16xbf16> to vector<8x16xf32>
    %81 = vector.broadcast %78 : vector<8x1xf32> to vector<8x16xf32>
    %82 = arith.mulf %81, %80 : vector<8x16xf32>
    %83 = arith.addf %77, %82 : vector<8x16xf32>
    %84 = arith.truncf %83 : vector<8x16xf32> to vector<8x16xbf16>
    %c0_21 = arith.constant 0 : index
    %c0_22 = arith.constant 0 : index
    %85 = vector.load %arg8[%c0_21, %c0_22] : memref<16x16xbf16, #tpu.memory_space<vmem>>, vector<16x16xbf16>
    %cst_23 = arith.constant dense<0.000000e+00> : vector<8x16xf32>
    %86 = tpu.matmul %84, %85, %cst_23 {dimension_numbers = #tpu.dot_dimension_numbers<[1], [0], [0], [1], [0, 0, 1, 1], [], []>} : vector<8x16xbf16>, vector<16x16xbf16>, vector<8x16xf32> -> vector<8x16xf32>
    %87 = arith.addf %13, %86 : vector<8x16xf32>
    %c0_24 = arith.constant 0 : index
    %c0_25 = arith.constant 0 : index
    %88 = vector.load %arg9[%c0_24, %c0_25] : memref<1x16xf32, #tpu.memory_space<vmem>>, vector<1x16xf32>
    %89 = vector.broadcast %88 : vector<1x16xf32> to vector<8x16xf32>
    %90 = arith.addf %87, %89 : vector<8x16xf32>
    %91 = arith.negf %90 : vector<8x16xf32>
    %92 = math.exp %91 : vector<8x16xf32>
    %cst_26 = arith.constant 1.000000e+00 : f32
    %93 = vector.broadcast %cst_26 : f32 to vector<8x16xf32>
    %94 = arith.addf %93, %92 : vector<8x16xf32>
    %95 = arith.divf %93, %94 : vector<8x16xf32>
    %c0_27 = arith.constant 0 : index
    %c0_28 = arith.constant 0 : index
    %c0_29 = arith.constant 0 : index
    %96 = vector.load %arg10[%c0_27, %c0_28, %c0_29] : memref<1x8x16xf32, #tpu.memory_space<vmem>>, vector<1x8x16xf32>
    %97 = vector.shape_cast %96 : vector<1x8x16xf32> to vector<8x16xf32>
    %98 = vector.shape_cast %95 : vector<8x16xf32> to vector<1x8x16xf32>
    tpu.vector_store %arg10[%c0_27, %c0_28, %c0_29], %98 {strides = array<i32>} : memref<1x8x16xf32, #tpu.memory_space<vmem>>, vector<1x8x16xf32>,
    return
  }
  func.func @transform_0(%arg0: i32, %arg1: i32) -> (i32, i32, i32) {
    %c0_i32 = arith.constant 0 : i32
    %c0_i32_0 = arith.constant 0 : i32
    return %arg0, %arg1, %c0_i32 : i32, i32, i32
  }
  func.func @transform_1(%arg0: i32, %arg1: i32) -> (i32, i32, i32) {
    %c0_i32 = arith.constant 0 : i32
    %c0_i32_0 = arith.constant 0 : i32
    %c0_i32_1 = arith.constant 0 : i32
    return %arg0, %c0_i32, %c0_i32_0 : i32, i32, i32
  }
  func.func @transform_2(%arg0: i32, %arg1: i32) -> (i32, i32) {
    %c0_i32 = arith.constant 0 : i32
    %c0_i32_0 = arith.constant 0 : i32
    %c0_i32_1 = arith.constant 0 : i32
    return %c0_i32, %c0_i32_0 : i32, i32
  }
  func.func @transform_3(%arg0: i32, %arg1: i32) -> (i32, i32) {
    %c0_i32 = arith.constant 0 : i32
    %c0_i32_0 = arith.constant 0 : i32
    %c0_i32_1 = arith.constant 0 : i32
    return %c0_i32, %c0_i32_0 : i32, i32
  }
  func.func @transform_4(%arg0: i32, %arg1: i32) -> (i32, i32) {
    %c0_i32 = arith.constant 0 : i32
    %c0_i32_0 = arith.constant 0 : i32
    %c0_i32_1 = arith.constant 0 : i32
    return %c0_i32, %c0_i32_0 : i32, i32
  }
  func.func @transform_5(%arg0: i32, %arg1: i32) -> (i32, i32) {
    %c0_i32 = arith.constant 0 : i32
    %c0_i32_0 = arith.constant 0 : i32
    %c0_i32_1 = arith.constant 0 : i32
    return %c0_i32, %c0_i32_0 : i32, i32
  }
  func.func @transform_6(%arg0: i32, %arg1: i32) -> (i32, i32) {
    %c0_i32 = arith.constant 0 : i32
    %c0_i32_0 = arith.constant 0 : i32
    %c0_i32_1 = arith.constant 0 : i32
    return %c0_i32, %c0_i32_0 : i32, i32
  }
  func.func @transform_7(%arg0: i32, %arg1: i32) -> (i32, i32) {
    %c0_i32 = arith.constant 0 : i32
    %c0_i32_0 = arith.constant 0 : i32
    %c0_i32_1 = arith.constant 0 : i32
    return %c0_i32, %c0_i32_0 : i32, i32
  }
  func.func @transform_8(%arg0: i32, %arg1: i32) -> (i32, i32, i32) {
    %c0_i32 = arith.constant 0 : i32
    %c0_i32_0 = arith.constant 0 : i32
    return %arg0, %arg1, %c0_i32 : i32, i32, i32
  }
  func.func @transform_9(%arg0: i32, %arg1: i32) -> (i32, i32, i32) {
    %c0_i32 = arith.constant 0 : i32
    %c0_i32_0 = arith.constant 0 : i32
    return %arg0, %arg1, %c0_i32 : i32, i32, i32
  }
}

</mosaic_0001>

<llo_original>
// kernel: tpu_custom_call.1
$region0: #{tpu_custom_call.1}
  #allocation0 [shape = 'u32[]', space=smem, size = 0x4, offset = 0x4, fixed_abs, tag = 'smem constant byte address 0x4 - core index']
  #allocation1 [shape = 'u32[144,128]{1,0:T(1,128)}', space=vmem, size = 0x12000, scoped, tag = 'internal scratch']
  %s0 = inlined_call_operand.vmem [shape: bf16[2,8,32], index: 0, kind: input, shape index: {}]
  %s1 = inlined_call_operand.vmem [shape: bf16[2,12,16], index: 1, kind: input, shape index: {}]
  %s2 = inlined_call_operand.vmem [shape: bf16[32,32], index: 2, kind: input, shape index: {}]
  %s3 = inlined_call_operand.vmem [shape: bf16[16,16], index: 3, kind: input, shape index: {}]
  %s4 = inlined_call_operand.vmem [shape: f32[1,16], index: 4, kind: input, shape index: {}]
  %s5 = inlined_call_operand.hbm [shape: bf16[80,128], index: 5, kind: input, shape index: {}]
  %s6 = inlined_call_operand.hbm [shape: bf16[16,16], index: 6, kind: input, shape index: {}]
  %s7 = inlined_call_operand.vmem [shape: f32[1,16], index: 7, kind: input, shape index: {}]
  %s8 = inlined_call_operand.hbm [shape: f32[2,8,16], index: 8, kind: output, shape index: {0}]
  %s9 = inlined_call_operand.hbm [shape: f32[2,8,128], index: 9, kind: output, shape index: {1}]
  %10 = xla_tuple %s8, %s9
  %s11 = sld [smem:[#allocation0]]
  $region81: #{tpu_custom_call.1} parent=0
    _
  %s13 = ssub.s32 1, %s11
  %s14 = scalar_select 0, %s13, %s11
  $region1: #{tpu_custom_call.1} parent=0
    #allocation2 [shape = 'u8[20480]{0}', space=vmem, size = 0x5000, scoped, tag = 'input window, operand 5, single buffered']
    #allocation3 [shape = 's32[2]{0}', space=sflag, size = 0x8, scoped, tag = 'scoped memory for tpu_custom_call.1']
    #allocation4 [shape = 's32[2]{0}', space=sflag, size = 0x8, scoped, tag = 'scoped memory for tpu_custom_call.1']
    #allocation5 [shape = 'u8[4096]{0}', space=vmem, size = 0x1000, scoped, tag = 'input window, operand 6, single buffered']
    #allocation6 [shape = 's32[1]{0}', space=sflag, size = 0x4, scoped, tag = 'scoped memory for tpu_custom_call.1']
    #allocation7 [shape = 'u8[8192]{0}', space=vmem, size = 0x2000, scoped, tag = 'output window, operand 0']
    #allocation8 [shape = 'u8[8192]{0}', space=vmem, size = 0x2000, scoped, tag = 'output window, operand 1']
    #allocation9 [shape = 's32[2]{0}', space=sflag, size = 0x8, scoped, tag = 'scoped memory for tpu_custom_call.1']
    %15 = vsyncpa [#allocation3], 0
    %16 = vsyncpa [#allocation6], 0
    %17 = vsyncpa [#allocation4], 0
    %s18 = scalar_lea.sflag [#allocation4], 1
    %19 = vsyncpa %s18, 0
    %20 = vsyncpa [#allocation9], 0
    %s21 = scalar_lea.sflag [#allocation9], 1
    %22 = vsyncpa %s21, 0
    loop: start=0, step=1, limit=4
    $region2: #{tpu_custom_call.1} parent=1 // loop_pre_header
      _
    $region3: #{tpu_custom_call.1} parent=1 // loop_header
      %s24 = sphi 0, %s28
      %p25 = scmp.ge.s32.totalorder %s24, 4
      %s31 = sphi 0, %s43
      %s32 = sphi 0, %s39
      %s33 = sphi 0, %s31
      %s34 = sphi 0, %s32
      %s35 = sphi 0, %s33
      %s36 = sphi 0, %s34
      %s48 = sphi 0, %s50
      %s51 = sphi 0, %s48
      %s52 = sphi 0, %s51
      %s68 = sphi 0, %s52
      %s74 = sphi 0, %s76
      %s77 = sphi 0, %s74
      %s78 = sphi 0, %s77
      %s94 = sphi 0, %s78
      %s98 = sphi 0, %s98
      %s100 = sphi 0, %s98
      %s101 = sphi 0, %s100
      %s115 = sphi 0, %s101
      %s119 = sphi 0, %s119
      %s121 = sphi 0, %s119
      %s122 = sphi 0, %s121
      %s136 = sphi 0, %s122
      %s140 = sphi 0, %s140
      %s142 = sphi 0, %s140
      %s143 = sphi 0, %s142
      %s157 = sphi 0, %s143
      %s161 = sphi 0, %s161
      %s163 = sphi 0, %s161
      %s164 = sphi 0, %s163
      %s178 = sphi 0, %s164
      %s182 = sphi 0, %s182
      %s184 = sphi 0, %s182
      %s185 = sphi 0, %s184
      %s199 = sphi 0, %s185
      %s203 = sphi 0, %s203
      %s205 = sphi 0, %s203
      %s206 = sphi 0, %s205
      %s220 = sphi 0, %s206
      %s228 = sphi 0, %s230
      %s231 = sphi 0, %s228
      %s232 = sphi 0, %s231
      %s248 = sphi 0, %s232
      %s256 = sphi 0, %s258
      %s259 = sphi 0, %s256
      %s260 = sphi 0, %s259
      %s276 = sphi 0, %s260
    $region4: #{tpu_custom_call.1} parent=1 // loop_header_branch
      %27 = sbr.rel (%p25) target = $region8
    $region5: #{tpu_custom_call.1} parent=1 // loop_body
      %s29 = ssub.s32 %s24, 1
      %s30 = ssub.s32 %s24, 2
      %s37 = sadd.s32 1, %s32
      %p38 = scmp.ge.s32.totalorder %s37, 1
      %s39 = scalar_select %p38, 0, %s37
      %s40 = sadd.s32 1, %s31
      %s41 = scalar_select %p38, %s40, %s31
      %p42 = scmp.ge.s32.totalorder %s41, 2
      %s43 = scalar_select %p42, 0, %s41
      %s44 = ssub.s32 %s31, %s43
      %s45 = ssub.s32 %s32, %s39
      %s46 = sor.u32 %s44, %s45
      %p47 = scmp.eq.s32.totalorder %s46, 0
      %s49 = sadd.s32 %s48, 1
      %s50 = scalar_select %p47, %s48, %s49
      %p53 = pneg %p47
      %p54 = scmp.eq.s32.totalorder %s24, 1
      %p55 = por %p53, %p54
      %p56 = scmp.ne.s32.totalorder %s48, %s51
      %p57 = scmp.eq.s32.totalorder %s24, 0
      %p58 = por %p56, %p57
      %p59 = scmp.ne.s32.totalorder %s48, %s51
      %p60 = scmp.eq.s32.totalorder %s29, 1
      %p61 = por %p59, %p60
      %p62 = scmp.ne.s32.totalorder %s51, %s52
      %p63 = scmp.eq.s32.totalorder %s29, 0
      %p64 = por %p62, %p63
      %p65 = scmp.ne.s32.totalorder %s51, %s52
      %p66 = scmp.eq.s32.totalorder %s30, 1
      %p67 = por %p65, %p66
      %p69 = scmp.ne.s32.totalorder %s52, %s68
      %p70 = scmp.eq.s32.totalorder %s30, 0
      %p71 = por %p69, %p70
      %s72 = ssub.s32 %s31, %s43
      %p73 = scmp.eq.s32.totalorder %s72, 0
      %s75 = sadd.s32 %s74, 1
      %s76 = scalar_select %p73, %s74, %s75
      %p79 = pneg %p73
      %p80 = scmp.eq.s32.totalorder %s24, 1
      %p81 = por %p79, %p80
      %p82 = scmp.ne.s32.totalorder %s74, %s77
      %p83 = scmp.eq.s32.totalorder %s24, 0
      %p84 = por %p82, %p83
      %p85 = scmp.ne.s32.totalorder %s74, %s77
      %p86 = scmp.eq.s32.totalorder %s29, 1
      %p87 = por %p85, %p86
      %p88 = scmp.ne.s32.totalorder %s77, %s78
      %p89 = scmp.eq.s32.totalorder %s29, 0
      %p90 = por %p88, %p89
      %p91 = scmp.ne.s32.totalorder %s77, %s78
      %p92 = scmp.eq.s32.totalorder %s30, 1
      %p93 = por %p91, %p92
      %p95 = scmp.ne.s32.totalorder %s78, %s94
      %p96 = scmp.eq.s32.totalorder %s30, 0
      %p97 = por %p95, %p96
      %s99 = sadd.s32 %s98, 1
      %p102 = scmp.eq.s32.totalorder %s24, 1
      %p103 = scmp.ne.s32.totalorder %s98, %s100
      %p104 = scmp.eq.s32.totalorder %s24, 0
      %p105 = por %p103, %p104
      %p106 = scmp.ne.s32.totalorder %s98, %s100
      %p107 = scmp.eq.s32.totalorder %s29, 1
      %p108 = por %p106, %p107
      %p109 = scmp.ne.s32.totalorder %s100, %s101
      %p110 = scmp.eq.s32.totalorder %s29, 0
      %p111 = por %p109, %p110
      %p112 = scmp.ne.s32.totalorder %s100, %s101
      %p113 = scmp.eq.s32.totalorder %s30, 1
      %p114 = por %p112, %p113
      %p116 = scmp.ne.s32.totalorder %s101, %s115
      %p117 = scmp.eq.s32.totalorder %s30, 0
      %p118 = por %p116, %p117
      %s120 = sadd.s32 %s119, 1
      %p123 = scmp.eq.s32.totalorder %s24, 1
      %p124 = scmp.ne.s32.totalorder %s119, %s121
      %p125 = scmp.eq.s32.totalorder %s24, 0
      %p126 = por %p124, %p125
      %p127 = scmp.ne.s32.totalorder %s119, %s121
      %p128 = scmp.eq.s32.totalorder %s29, 1
      %p129 = por %p127, %p128
      %p130 = scmp.ne.s32.totalorder %s121, %s122
      %p131 = scmp.eq.s32.totalorder %s29, 0
      %p132 = por %p130, %p131
      %p133 = scmp.ne.s32.totalorder %s121, %s122
      %p134 = scmp.eq.s32.totalorder %s30, 1
      %p135 = por %p133, %p134
      %p137 = scmp.ne.s32.totalorder %s122, %s136
      %p138 = scmp.eq.s32.totalorder %s30, 0
      %p139 = por %p137, %p138
      %s141 = sadd.s32 %s140, 1
      %p144 = scmp.eq.s32.totalorder %s24, 1
      %p145 = scmp.ne.s32.totalorder %s140, %s142
      %p146 = scmp.eq.s32.totalorder %s24, 0
      %p147 = por %p145, %p146
      %p148 = scmp.ne.s32.totalorder %s140, %s142
      %p149 = scmp.eq.s32.totalorder %s29, 1
      %p150 = por %p148, %p149
      %p151 = scmp.ne.s32.totalorder %s142, %s143
      %p152 = scmp.eq.s32.totalorder %s29, 0
      %p153 = por %p151, %p152
      %p154 = scmp.ne.s32.totalorder %s142, %s143
      %p155 = scmp.eq.s32.totalorder %s30, 1
      %p156 = por %p154, %p155
      %p158 = scmp.ne.s32.totalorder %s143, %s157
      %p159 = scmp.eq.s32.totalorder %s30, 0
      %p160 = por %p158, %p159
      %s162 = sadd.s32 %s161, 1
      %p165 = scmp.eq.s32.totalorder %s24, 1
      %p166 = scmp.ne.s32.totalorder %s161, %s163
      %p167 = scmp.eq.s32.totalorder %s24, 0
      %p168 = por %p166, %p167
      %p169 = scmp.ne.s32.totalorder %s161, %s163
      %p170 = scmp.eq.s32.totalorder %s29, 1
      %p171 = por %p169, %p170
      %p172 = scmp.ne.s32.totalorder %s163, %s164
      %p173 = scmp.eq.s32.totalorder %s29, 0
      %p174 = por %p172, %p173
      %p175 = scmp.ne.s32.totalorder %s163, %s164
      %p176 = scmp.eq.s32.totalorder %s30, 1
      %p177 = por %p175, %p176
      %p179 = scmp.ne.s32.totalorder %s164, %s178
      %p180 = scmp.eq.s32.totalorder %s30, 0
      %p181 = por %p179, %p180
      %s183 = sadd.s32 %s182, 1
      %p186 = scmp.eq.s32.totalorder %s24, 1
      %p187 = scmp.ne.s32.totalorder %s182, %s184
      %p188 = scmp.eq.s32.totalorder %s24, 0
      %p189 = por %p187, %p188
      %p190 = scmp.ne.s32.totalorder %s182, %s184
      %p191 = scmp.eq.s32.totalorder %s29, 1
      %p192 = por %p190, %p191
      %p193 = scmp.ne.s32.totalorder %s184, %s185
      %p194 = scmp.eq.s32.totalorder %s29, 0
      %p195 = por %p193, %p194
      %p196 = scmp.ne.s32.totalorder %s184, %s185
      %p197 = scmp.eq.s32.totalorder %s30, 1
      %p198 = por %p196, %p197
      %p200 = scmp.ne.s32.totalorder %s185, %s199
      %p201 = scmp.eq.s32.totalorder %s30, 0
      %p202 = por %p200, %p201
      %s204 = sadd.s32 %s203, 1
      %p207 = scmp.eq.s32.totalorder %s24, 1
      %p208 = scmp.ne.s32.totalorder %s203, %s205
      %p209 = scmp.eq.s32.totalorder %s24, 0
      %p210 = por %p208, %p209
      %p211 = scmp.ne.s32.totalorder %s203, %s205
      %p212 = scmp.eq.s32.totalorder %s29, 1
      %p213 = por %p211, %p212
      %p214 = scmp.ne.s32.totalorder %s205, %s206
      %p215 = scmp.eq.s32.totalorder %s29, 0
      %p216 = por %p214, %p215
      %p217 = scmp.ne.s32.totalorder %s205, %s206
      %p218 = scmp.eq.s32.totalorder %s30, 1
      %p219 = por %p217, %p218
      %p221 = scmp.ne.s32.totalorder %s206, %s220
      %p222 = scmp.eq.s32.totalorder %s30, 0
      %p223 = por %p221, %p222
      %s224 = ssub.s32 %s31, %s43
      %s225 = ssub.s32 %s32, %s39
      %s226 = sor.u32 %s224, %s225
      %p227 = scmp.eq.s32.totalorder %s226, 0
      %s229 = sadd.s32 %s228, 1
      %s230 = scalar_select %p227, %s228, %s229
      %p233 = pneg %p227
      %p234 = scmp.eq.s32.totalorder %s24, 1
      %p235 = por %p233, %p234
      %p236 = scmp.ne.s32.totalorder %s228, %s231
      %p237 = scmp.eq.s32.totalorder %s24, 0
      %p238 = por %p236, %p237
      %p239 = scmp.ne.s32.totalorder %s228, %s231
      %p240 = scmp.eq.s32.totalorder %s29, 1
      %p241 = por %p239, %p240
      %p242 = scmp.ne.s32.totalorder %s231, %s232
      %p243 = scmp.eq.s32.totalorder %s29, 0
      %p244 = por %p242, %p243
      %p245 = scmp.ne.s32.totalorder %s231, %s232
      %p246 = scmp.eq.s32.totalorder %s30, 1
      %p247 = por %p245, %p246
      %p249 = scmp.ne.s32.totalorder %s232, %s248
      %p250 = scmp.eq.s32.totalorder %s30, 0
      %p251 = por %p249, %p250
      %s252 = ssub.s32 %s31, %s43
      %s253 = ssub.s32 %s32, %s39
      %s254 = sor.u32 %s252, %s253
      %p255 = scmp.eq.s32.totalorder %s254, 0
      %s257 = sadd.s32 %s256, 1
      %s258 = scalar_select %p255, %s256, %s257
      %p261 = pneg %p255
      %p262 = scmp.eq.s32.totalorder %s24, 1
      %p263 = por %p261, %p262
      %p264 = scmp.ne.s32.totalorder %s256, %s259
      %p265 = scmp.eq.s32.totalorder %s24, 0
      %p266 = por %p264, %p265
      %p267 = scmp.ne.s32.totalorder %s256, %s259
      %p268 = scmp.eq.s32.totalorder %s29, 1
      %p269 = por %p267, %p268
      %p270 = scmp.ne.s32.totalorder %s259, %s260
      %p271 = scmp.eq.s32.totalorder %s29, 0
      %p272 = por %p270, %p271
      %p273 = scmp.ne.s32.totalorder %s259, %s260
      %p274 = scmp.eq.s32.totalorder %s30, 1
      %p275 = por %p273, %p274
      %p277 = scmp.ne.s32.totalorder %s260, %s276
      %p278 = scmp.eq.s32.totalorder %s30, 0
      %p279 = por %p277, %p278
      %p280 = scmp.le.s32.totalorder 1, %s24
      %p281 = scmp.lt.s32.totalorder %s24, 3
      %p282 = pnand %p280, %p281
      %p283 = pneg %p282
      // Predicated region
      $region9: #{tpu_custom_call.1} parent=5 // pred_check
        _
      $region10: #{tpu_custom_call.1} parent=5 // pred_check_branch
        %285 = sbr.rel (%p282) target = $region12
      $region11: #{tpu_custom_call.1} parent=5 // pred_region
        %s286 = ssub.s32 %s24, 1
        // Predicated region
        $region13: #{tpu_custom_call.1} parent=11 // pred_check
          %p287 = pneg %p111
        $region14: #{tpu_custom_call.1} parent=11 // pred_check_branch
          %289 = sbr.rel (%p287) target = $region16
        $region15: #{tpu_custom_call.1} parent=11 // pred_region
          _
        $region16: #{tpu_custom_call.1} parent=11 // pred_fallthru
          _
        // Predicated region
        $region17: #{tpu_custom_call.1} parent=11 // pred_check
          %p290 = pneg %p132
        $region18: #{tpu_custom_call.1} parent=11 // pred_check_branch
          %292 = sbr.rel (%p290) target = $region20
        $region19: #{tpu_custom_call.1} parent=11 // pred_region
          _
        $region20: #{tpu_custom_call.1} parent=11 // pred_fallthru
          _
        // Predicated region
        $region21: #{tpu_custom_call.1} parent=11 // pred_check
          %p293 = pneg %p153
        $region22: #{tpu_custom_call.1} parent=11 // pred_check_branch
          %295 = sbr.rel (%p293) target = $region24
        $region23: #{tpu_custom_call.1} parent=11 // pred_region
          _
        $region24: #{tpu_custom_call.1} parent=11 // pred_fallthru
          _
        // Predicated region
        $region25: #{tpu_custom_call.1} parent=11 // pred_check
          %p296 = pneg %p174
        $region26: #{tpu_custom_call.1} parent=11 // pred_check_branch
          %298 = sbr.rel (%p296) target = $region28
        $region27: #{tpu_custom_call.1} parent=11 // pred_region
          %s300 = ssub.s32 640, 640
          %301 = vsyncadd [#allocation3], %s300
          %s302 = sshll.u32 [#allocation2], 4
          %s303 = int_to_ptr.vmem [resolvable:$true] %s302
          %308 = dma.hbm_to_vmem [thread:$0]  %s5, 640, %s303, [#allocation3], 64, 64, 4
        $region28: #{tpu_custom_call.1} parent=11 // pred_fallthru
          _
        // Predicated region
        $region29: #{tpu_custom_call.1} parent=11 // pred_check
          %p309 = pneg %p195
        $region30: #{tpu_custom_call.1} parent=11 // pred_check_branch
          %311 = sbr.rel (%p309) target = $region32
        $region31: #{tpu_custom_call.1} parent=11 // pred_region
          %s313 = ssub.s32 128, 128
          %314 = vsyncadd [#allocation6], %s313
          %s315 = sshll.u32 [#allocation5], 4
          %s316 = int_to_ptr.vmem [resolvable:$true] %s315
          %321 = dma.hbm_to_vmem [thread:$0]  %s6, 128, %s316, [#allocation6], 64, 64, 4
        $region32: #{tpu_custom_call.1} parent=11 // pred_fallthru
          _
        // Predicated region
        $region33: #{tpu_custom_call.1} parent=11 // pred_check
          %p322 = pneg %p216
        $region34: #{tpu_custom_call.1} parent=11 // pred_check_branch
          %324 = sbr.rel (%p322) target = $region36
        $region35: #{tpu_custom_call.1} parent=11 // pred_region
          _
        $region36: #{tpu_custom_call.1} parent=11 // pred_fallthru
          _
      $region12: #{tpu_custom_call.1} parent=5 // pred_fallthru
        _
      %p325 = scmp.lt.s32.totalorder %s24, 2
      // Predicated region
      $region37: #{tpu_custom_call.1} parent=5 // pred_check
        %p326 = pneg %p325
      $region38: #{tpu_custom_call.1} parent=5 // pred_check_branch
        %328 = sbr.rel (%p326) target = $region40
      $region39: #{tpu_custom_call.1} parent=5 // pred_region
        // Predicated region
        $region41: #{tpu_custom_call.1} parent=39 // pred_check
          %p329 = pneg %p58
        $region42: #{tpu_custom_call.1} parent=39 // pred_check_branch
          %331 = sbr.rel (%p329) target = $region44
        $region43: #{tpu_custom_call.1} parent=39 // pred_region
          %p332 = scmp.lt.s32.totalorder %s31, 1
          %s333 = scalar_select %p332, %s31, 1
          %p334 = scmp.lt.s32.totalorder %s32, 0
          %s335 = scalar_select %p334, %s32, 0
          %s336 = sadd.s32 %s335, %s333
          %s337 = smul.addr %s336, 4
          %s338 = scalar_lea.vmem %s0, %s337
        $region44: #{tpu_custom_call.1} parent=39 // pred_fallthru
          _
        // Predicated region
        $region45: #{tpu_custom_call.1} parent=39 // pred_check
          %p339 = pneg %p84
        $region46: #{tpu_custom_call.1} parent=39 // pred_check_branch
          %341 = sbr.rel (%p339) target = $region48
        $region47: #{tpu_custom_call.1} parent=39 // pred_region
          %p342 = scmp.lt.s32.totalorder %s31, 1
          %s343 = scalar_select %p342, %s31, 1
          %s344 = smul.addr %s343, 2
          %s345 = smul.addr %s344, 4
          %s346 = scalar_lea.vmem %s1, %s345
        $region48: #{tpu_custom_call.1} parent=39 // pred_fallthru
          _
      $region40: #{tpu_custom_call.1} parent=5 // pred_fallthru
        _
      %p347 = scmp.le.s32.totalorder 1, %s24
      %p348 = scmp.lt.s32.totalorder %s24, 3
      %p349 = pnand %p347, %p348
      %p350 = pneg %p349
      // Predicated region
      $region49: #{tpu_custom_call.1} parent=5 // pred_check
        _
      $region50: #{tpu_custom_call.1} parent=5 // pred_check_branch
        %352 = sbr.rel (%p349) target = $region52
      $region51: #{tpu_custom_call.1} parent=5 // pred_region
        %s353 = ssub.s32 %s24, 1
        // Predicated region
        $region53: #{tpu_custom_call.1} parent=51 // pred_check
          %p354 = pneg %p174
        $region54: #{tpu_custom_call.1} parent=51 // pred_check_branch
          %356 = sbr.rel (%p354) target = $region56
        $region55: #{tpu_custom_call.1} parent=51 // pred_region
          %357 = dma.done [#allocation3], 640
        $region56: #{tpu_custom_call.1} parent=51 // pred_fallthru
          _
        // Predicated region
        $region57: #{tpu_custom_call.1} parent=51 // pred_check
          %p358 = pneg %p195
        $region58: #{tpu_custom_call.1} parent=51 // pred_check_branch
          %360 = sbr.rel (%p358) target = $region60
        $region59: #{tpu_custom_call.1} parent=51 // pred_region
          %361 = dma.done [#allocation6], 128
        $region60: #{tpu_custom_call.1} parent=51 // pred_fallthru
          _
        %p362 = scmp.lt.s32.totalorder %s33, 1
        %s363 = scalar_select %p362, %s33, 1
        %p364 = scmp.lt.s32.totalorder %s34, 0
        %s365 = scalar_select %p364, %s34, 0
        %s366 = sadd.s32 %s365, %s363
        %s367 = smul.addr %s366, 4
        %s368 = scalar_lea.vmem %s0, %s367
        %p369 = pneg %p64
        %p370 = pneg %p61
        %p371 = scmp.lt.s32.totalorder %s33, 1
        %s372 = scalar_select %p371, %s33, 1
        %s373 = smul.addr %s372, 2
        %s374 = smul.addr %s373, 4
        %s375 = scalar_lea.vmem %s1, %s374
        %p376 = pneg %p90
        %p377 = pneg %p87
        %p378 = pneg %p111
        %p379 = pneg %p108
        %p380 = pneg %p132
        %p381 = pneg %p129
        %p382 = pneg %p153
        %p383 = pneg %p150
        %p384 = pneg %p174
        %p385 = pneg %p171
        %p386 = pneg %p195
        %p387 = pneg %p192
        %p388 = pneg %p216
        %p389 = pneg %p213
        %p390 = pneg %p244
        %p391 = pneg %p241
        %s392 = sand.u32 %s231, 1
        %s393 = scalar_lea.sflag [#allocation4], %s392
        %s394 = sand.u32 %s231, 1
        %s395 = smul.addr %s394, 8
        %s396 = scalar_lea.vmem [#allocation7], %s395
        %p397 = pneg %p272
        %p398 = pneg %p269
        %s399 = sand.u32 %s259, 1
        %s400 = scalar_lea.sflag [#allocation9], %s399
        %s401 = sand.u32 %s259, 1
        %s402 = smul.addr %s401, 8
        %s403 = scalar_lea.vmem [#allocation8], %s402
        %p404 = scmp.lt.s32.totalorder %s33, 1
        %s405 = scalar_select %p404, %s33, 1
        %p406 = scmp.lt.s32.totalorder %s34, 0
        %s407 = scalar_select %p406, %s34, 0
        %s408 = sadd.s32 %s407, %s405
        %s409 = smul.addr %s408, 4
        %s410 = scalar_lea.vmem %s0, %s409
        %p411 = scmp.lt.s32.totalorder %s33, 1
        %s412 = scalar_select %p411, %s33, 1
        %s413 = smul.addr %s412, 2
        %s414 = smul.addr %s413, 4
        %s415 = scalar_lea.vmem %s1, %s414
        %s417 = smul.u32 %s34, 8
        %v418 = vld [vmem:[%s410] sm:$0xf]
        %s419 = sshra.s32 %s417, 3
        %s420 = sand.u32 %s417, 7
        %s421 = smul.addr %s419, 4
        %s422 = scalar_lea.vmem %s415, %s421
        %v423 = vld [vmem:[%s422] sm:$0xf]
        %v424 = vld [vmem:[%s422 + $0x4] sm:$0x3]
        %v425 = vld [vmem:[%s2] sm:$0xf]
        %v426 = vld [vmem:[%s2 + $0x4] sm:$0xf]
        %v427 = vld [vmem:[%s2 + $0x8] sm:$0xf]
        %v428 = vld [vmem:[%s2 + $0xc] sm:$0xf]
        %v433 = vunpack.c.l.b16 %v425
        %v434 = vunpack.c.l.b16 %v426
        %v435 = vunpack.c.l.b16 %v427
        %v436 = vunpack.c.l.b16 %v428
        %v437 = vpack.c.b16 %v434, %v433
        %v438 = vpack.c.b16 %v436, %v435
        %vm441 = vcmask 261120
        %v443 = vsel %vm441, %v418, 0
        %445 = vmatprep.subr.bf16.mxu0 0
        %446 = vmatpush1.bf16.msra.mxu0 0
        %447 = vmatprep.subr.bf16.mxu0 0
        %448 = vmatpush1.bf16.msra.mxu0 0
        %449 = vmatprep.subr.bf16.mxu0 0
        %450 = vmatpush1.bf16.msra.mxu0 0
        %451 = vmatprep.subr.bf16.mxu0 0
        %452 = vmatpush1.bf16.msra.mxu0 0
        %453 = vmatprep.subr.bf16.mxu0 0
        %454 = vmatpush1.bf16.msra.mxu0 0
        %455 = vmatprep.subr.bf16.mxu0 0
        %456 = vmatpush1.bf16.msra.mxu0 0
        %457 = vmatprep.subr.bf16.mxu0 0
        %458 = vmatpush1.bf16.msra.mxu0 %v438
        %459 = vmatprep.subr.bf16.mxu0 0
        %460 = vmatpush1.bf16.msra.mxu0 %v437
        %461 = vmatprep.subr.bf16.mxu0 0
        %462 = vmatpush2.bf16.msra.mxu0 0
        %463 = vmatprep.subr.bf16.mxu0 0
        %464 = vmatpush2.bf16.msra.mxu0 0
        %465 = vmatprep.subr.bf16.mxu0 0
        %466 = vmatpush2.bf16.msra.mxu0 0
        %467 = vmatprep.subr.bf16.mxu0 0
        %468 = vmatpush2.bf16.msra.mxu0 0
        %469 = vmatprep.subr.bf16.mxu0 0
        %470 = vmatpush2.bf16.msra.mxu0 0
        %471 = vmatprep.subr.bf16.mxu0 0
        %472 = vmatpush2.bf16.msra.mxu0 0
        %473 = vmatprep.subr.bf16.mxu0 0
        %474 = vmatpush2.bf16.msra.mxu0 0
        %475 = vmatprep.subr.bf16.mxu0 0
        %476 = vmatpush2.bf16.msra.mxu0 0
        %477 = vmatprep.mubr.bf16.mxu0 0
        %478 = vmatmul.mubr.bf16.gmra.mxu0 %v443
        %v479 = vpop.f32.mrf.mxu0
        %v480 = vadd.f32 0.0, %v479
        %v481 = vpop.f32.mrf.mxu0
        %v482 = vpop.f32.mrf.mxu0
        %v483 = vpop.f32.mrf.mxu0
        %484 = vdwg.mxu0
        %v485 = vld [vmem:[%s4] sm:$0x1]
        %v487 = vlaneseq
        %v488 = vshrl.u32 %v487, 7
        %v489 = vsub.s32 0, %v488
        %v490 = vrot.slane %v485, %v489
        %v492 = vadd.f32 %v480, %v490
        %v493 = vld [vmem:[%s3] sm:$0xf]
        %v494 = vld [vmem:[%s3 + $0x4] sm:$0xf]
        %v497 = vunpack.c.l.b16 %v423
        %v498 = vunpack.c.l.b16 %v424
        %v499 = vpack.c.b16 %v498, %v497
        %v502 = vunpack.c.l.b16 %v493
        %v503 = vunpack.c.l.b16 %v494
        %v504 = vpack.c.b16 %v503, %v502
        %vm506 = vcmask 130048
        %v508 = vsel %vm506, %v499, 0
        %510 = vmatprep.subr.bf16.mxu0 0
        %511 = vmatpush1.bf16.msra.mxu0 0
        %512 = vmatprep.subr.bf16.mxu0 0
        %513 = vmatpush1.bf16.msra.mxu0 0
        %514 = vmatprep.subr.bf16.mxu0 0
        %515 = vmatpush1.bf16.msra.mxu0 0
        %516 = vmatprep.subr.bf16.mxu0 0
        %517 = vmatpush1.bf16.msra.mxu0 0
        %518 = vmatprep.subr.bf16.mxu0 0
        %519 = vmatpush1.bf16.msra.mxu0 0
        %520 = vmatprep.subr.bf16.mxu0 0
        %521 = vmatpush1.bf16.msra.mxu0 0
        %522 = vmatprep.subr.bf16.mxu0 0
        %523 = vmatpush1.bf16.msra.mxu0 0
        %524 = vmatprep.subr.bf16.mxu0 0
        %525 = vmatpush1.bf16.msra.mxu0 %v504
        %526 = vmatprep.subr.bf16.mxu0 0
        %527 = vmatpush2.bf16.msra.mxu0 0
        %528 = vmatprep.subr.bf16.mxu0 0
        %529 = vmatpush2.bf16.msra.mxu0 0
        %530 = vmatprep.subr.bf16.mxu0 0
        %531 = vmatpush2.bf16.msra.mxu0 0
        %532 = vmatprep.subr.bf16.mxu0 0
        %533 = vmatpush2.bf16.msra.mxu0 0
        %534 = vmatprep.subr.bf16.mxu0 0
        %535 = vmatpush2.bf16.msra.mxu0 0
        %536 = vmatprep.subr.bf16.mxu0 0
        %537 = vmatpush2.bf16.msra.mxu0 0
        %538 = vmatprep.subr.bf16.mxu0 0
        %539 = vmatpush2.bf16.msra.mxu0 0
        %540 = vmatprep.subr.bf16.mxu0 0
        %541 = vmatpush2.bf16.msra.mxu0 0
        %542 = vmatprep.mubr.bf16.mxu0 0
        %543 = vmatmul.mubr.bf16.gmra.mxu0 %v508
        %v544 = vpop.f32.mrf.mxu0
        %v545 = vadd.f32 0.0, %v544
        %v546 = vpop.f32.mrf.mxu0
        %v547 = vpop.f32.mrf.mxu0
        %v548 = vadd.f32 0.0, %v547
        %v549 = vpop.f32.mrf.mxu0
        %550 = vdwg.mxu0
        %v551 = vadd.f32 %v492, %v545
        %v552 = vtanh.pop %v551
        %vm555 = vcmask 1046528
        %v556 = vrot.slane %v545, 1
        %v557 = vrot.slane %v548, 1
        %v558 = vsel %vm555, %v556, %v557
        %v560 = vadd.f32 %v492, %v558
        %v561 = vtanh.pop %v560
        %vm562 = vcmask 1045504
        %v563 = vrot.slane %v545, 2
        %v564 = vrot.slane %v548, 2
        %v565 = vsel %vm562, %v563, %v564
        %v567 = vadd.f32 %v492, %v565
        %v568 = vtanh.pop %v567
        %vm569 = vcmask 1044480
        %v570 = vrot.slane %v545, 3
        %v571 = vrot.slane %v548, 3
        %v572 = vsel %vm569, %v570, %v571
        %v574 = vadd.f32 %v492, %v572
        %v575 = vtanh.pop %v574
        %vm576 = vcmask 1043456
        %v577 = vrot.slane %v545, 4
        %v578 = vrot.slane %v548, 4
        %v579 = vsel %vm576, %v577, %v578
        %v581 = vadd.f32 %v492, %v579
        %v582 = vtanh.pop %v581
        %584 = vrot.lane.b32.xlu0 %v561, 16
        %v585 = vpop.permute.xlu0 %584
        %588 = vrot.lane.b32.xlu0 %v568, 32
        %v589 = vpop.permute.xlu0 %588
        %592 = vrot.lane.b32.xlu0 %v575, 48
        %v593 = vpop.permute.xlu0 %592
        %596 = vrot.lane.b32.xlu0 %v582, 64
        %v597 = vpop.permute.xlu0 %596
        %v599 = vsel %vm506, %v552, %v585
        %v600 = vsel %vm441, %v599, %v589
        %vm601 = vcmask 392192
        %v602 = vsel %vm601, %v600, %v593
        %vm603 = vcmask 523264
        %v604 = vsel %vm603, %v602, %v597
        %v605 = vpack.c.bf16 %v604, %v604
        %v606 = vld [vmem:[#allocation2] sm:$0xf]
        %v607 = vld [vmem:[#allocation2 + $0x4] sm:$0xf]
        %v608 = vld [vmem:[#allocation2 + $0x8] sm:$0xf]
        %v609 = vld [vmem:[#allocation2 + $0xc] sm:$0xf]
        %v610 = vld [vmem:[#allocation2 + $0x10] sm:$0xf]
        %v611 = vld [vmem:[#allocation2 + $0x14] sm:$0xf]
        %v612 = vld [vmem:[#allocation2 + $0x18] sm:$0xf]
        %v613 = vld [vmem:[#allocation2 + $0x1c] sm:$0xf]
        %v614 = vld [vmem:[#allocation2 + $0x20] sm:$0xf]
        %v615 = vld [vmem:[#allocation2 + $0x24] sm:$0xf]
        %v626 = vunpack.c.l.b16 %v606
        %v627 = vunpack.c.l.b16 %v607
        %v628 = vunpack.c.l.b16 %v608
        %v629 = vunpack.c.l.b16 %v609
        %v630 = vunpack.c.l.b16 %v610
        %v631 = vunpack.c.l.b16 %v611
        %v632 = vunpack.c.l.b16 %v612
        %v633 = vunpack.c.l.b16 %v613
        %v634 = vunpack.c.l.b16 %v614
        %v635 = vunpack.c.l.b16 %v615
        %v636 = vpack.c.b16 %v627, %v626
        %v637 = vpack.c.b16 %v629, %v628
        %v638 = vpack.c.b16 %v631, %v630
        %v639 = vpack.c.b16 %v633, %v632
        %v640 = vpack.c.b16 %v635, %v634
        %vm646 = vcmask 654336
        %v648 = vsel %vm646, %v605, 0
        %650 = vmatprep.subr.bf16.mxu0 0
        %651 = vmatpush1.bf16.msra.mxu0 0
        %652 = vmatprep.subr.bf16.mxu0 0
        %653 = vmatpush1.bf16.msra.mxu0 0
        %654 = vmatprep.subr.bf16.mxu0 0
        %655 = vmatpush1.bf16.msra.mxu0 0
        %656 = vmatprep.subr.bf16.mxu0 0
        %657 = vmatpush1.bf16.msra.mxu0 %v640
        %658 = vmatprep.subr.bf16.mxu0 0
        %659 = vmatpush1.bf16.msra.mxu0 %v639
        %660 = vmatprep.subr.bf16.mxu0 0
        %661 = vmatpush1.bf16.msra.mxu0 %v638
        %662 = vmatprep.subr.bf16.mxu0 0
        %663 = vmatpush1.bf16.msra.mxu0 %v637
        %664 = vmatprep.subr.bf16.mxu0 0
        %665 = vmatpush1.bf16.msra.mxu0 %v636
        %666 = vmatprep.subr.bf16.mxu0 0
        %667 = vmatpush2.bf16.msra.mxu0 0
        %668 = vmatprep.subr.bf16.mxu0 0
        %669 = vmatpush2.bf16.msra.mxu0 0
        %670 = vmatprep.subr.bf16.mxu0 0
        %671 = vmatpush2.bf16.msra.mxu0 0
        %672 = vmatprep.subr.bf16.mxu0 0
        %673 = vmatpush2.bf16.msra.mxu0 0
        %674 = vmatprep.subr.bf16.mxu0 0
        %675 = vmatpush2.bf16.msra.mxu0 0
        %676 = vmatprep.subr.bf16.mxu0 0
        %677 = vmatpush2.bf16.msra.mxu0 0
        %678 = vmatprep.subr.bf16.mxu0 0
        %679 = vmatpush2.bf16.msra.mxu0 0
        %680 = vmatprep.subr.bf16.mxu0 0
        %681 = vmatpush2.bf16.msra.mxu0 0
        %682 = vmatprep.mubr.bf16.mxu0 0
        %683 = vmatmul.mubr.bf16.gmra.mxu0 %v648
        %v684 = vpop.f32.mrf.mxu0
        %v685 = vadd.f32 0.0, %v684
        %v686 = vpop.f32.mrf.mxu0
        %v687 = vpop.f32.mrf.mxu0
        %v688 = vpop.f32.mrf.mxu0
        %689 = vdwg.mxu0
        %v690 = vlaneseq
        %v691 = vand.u32 %v690, 127
        %vm692 = vcmp.lt.s32.totalorder %v691, 5
        %v693 = vsel %vm692, %v685, -inf
        %694 = vmax.xlane.f32.xlu0 %v693
        %v695 = vpop.xlane.xlu0 %694
        %v696 = vsub.f32 %v693, %v695
        %v697 = vmul.f32 %v696, 1.442695
        %v698 = vpow.pop %v697
        %699 = vadd.xlane.f32.xlu0 %v698
        %v700 = vpop.xlane.xlu0 %699
        %v701 = vrcp.pop %v700
        %v702 = vmul.f32 %v698, %v701
        %703 = vst [vmem:[%s403] sm:$0xff] %v702
        %v704 = vunpack.c.l.bf16 %v423
        %706 = vset.pattern.permute.xlu0 0
        %707 = vperm.xlu0 %706, %v702
        %v708 = vpop.permute.xlu0 %707
        %v710 = vmul.f32 %v708, %v704
        %v711 = vadd.f32 %v710, 0.0
        %v712 = vunpack.c.l.bf16 %v424
        %713 = vset.pattern.permute.xlu0 1
        %714 = vperm.xlu0 %713, %v702
        %v715 = vpop.permute.xlu0 %714
        %v719 = vrot.slane %v704, 1
        %v720 = vrot.slane %v712, 1
        %v721 = vsel %vm555, %v719, %v720
        %v723 = vmul.f32 %v715, %v721
        %v724 = vadd.f32 %v711, %v723
        %725 = vset.pattern.permute.xlu0 2
        %726 = vperm.xlu0 %725, %v702
        %v727 = vpop.permute.xlu0 %726
        %v729 = vrot.slane %v704, 2
        %v730 = vrot.slane %v712, 2
        %v731 = vsel %vm562, %v729, %v730
        %v733 = vmul.f32 %v727, %v731
        %v734 = vadd.f32 %v724, %v733
        %735 = vset.pattern.permute.xlu0 3
        %736 = vperm.xlu0 %735, %v702
        %v737 = vpop.permute.xlu0 %736
        %v739 = vrot.slane %v704, 3
        %v740 = vrot.slane %v712, 3
        %v741 = vsel %vm569, %v739, %v740
        %v743 = vmul.f32 %v737, %v741
        %v744 = vadd.f32 %v734, %v743
        %745 = vset.pattern.permute.xlu0 4
        %746 = vperm.xlu0 %745, %v702
        %v747 = vpop.permute.xlu0 %746
        %v749 = vrot.slane %v704, 4
        %v750 = vrot.slane %v712, 4
        %v751 = vsel %vm576, %v749, %v750
        %v753 = vmul.f32 %v747, %v751
        %v754 = vadd.f32 %v744, %v753
        %v755 = vpack.c.bf16 %v754, %v754
        %v756 = vld [vmem:[#allocation5] sm:$0xf]
        %v757 = vld [vmem:[#allocation5 + $0x4] sm:$0xf]
        %v760 = vunpack.c.l.b16 %v756
        %v761 = vunpack.c.l.b16 %v757
        %v762 = vpack.c.b16 %v761, %v760
        %v765 = vsel %vm506, %v755, 0
        %767 = vmatprep.subr.bf16.mxu0 0
        %768 = vmatpush1.bf16.msra.mxu0 0
        %769 = vmatprep.subr.bf16.mxu0 0
        %770 = vmatpush1.bf16.msra.mxu0 0
        %771 = vmatprep.subr.bf16.mxu0 0
        %772 = vmatpush1.bf16.msra.mxu0 0
        %773 = vmatprep.subr.bf16.mxu0 0
        %774 = vmatpush1.bf16.msra.mxu0 0
        %775 = vmatprep.subr.bf16.mxu0 0
        %776 = vmatpush1.bf16.msra.mxu0 0
        %777 = vmatprep.subr.bf16.mxu0 0
        %778 = vmatpush1.bf16.msra.mxu0 0
        %779 = vmatprep.subr.bf16.mxu0 0
        %780 = vmatpush1.bf16.msra.mxu0 0
        %781 = vmatprep.subr.bf16.mxu0 0
        %782 = vmatpush1.bf16.msra.mxu0 %v762
        %783 = vmatprep.subr.bf16.mxu0 0
        %784 = vmatpush2.bf16.msra.mxu0 0
        %785 = vmatprep.subr.bf16.mxu0 0
        %786 = vmatpush2.bf16.msra.mxu0 0
        %787 = vmatprep.subr.bf16.mxu0 0
        %788 = vmatpush2.bf16.msra.mxu0 0
        %789 = vmatprep.subr.bf16.mxu0 0
        %790 = vmatpush2.bf16.msra.mxu0 0
        %791 = vmatprep.subr.bf16.mxu0 0
        %792 = vmatpush2.bf16.msra.mxu0 0
        %793 = vmatprep.subr.bf16.mxu0 0
        %794 = vmatpush2.bf16.msra.mxu0 0
        %795 = vmatprep.subr.bf16.mxu0 0
        %796 = vmatpush2.bf16.msra.mxu0 0
        %797 = vmatprep.subr.bf16.mxu0 0
        %798 = vmatpush2.bf16.msra.mxu0 0
        %799 = vmatprep.mubr.bf16.mxu0 0
        %800 = vmatmul.mubr.bf16.gmra.mxu0 %v765
        %v801 = vpop.f32.mrf.mxu0
        %v802 = vadd.f32 0.0, %v801
        %v803 = vpop.f32.mrf.mxu0
        %v804 = vpop.f32.mrf.mxu0
        %v805 = vpop.f32.mrf.mxu0
        %806 = vdwg.mxu0
        %808 = vrot.lane.b32.xlu0 %v802, 16
        %v809 = vpop.permute.xlu0 %808
        %v811 = vadd.f32 %v480, %v809
        %v812 = vld [vmem:[%s7] sm:$0x1]
        %v814 = vlaneseq
        %v815 = vshrl.u32 %v814, 7
        %v816 = vsub.s32 0, %v815
        %v817 = vrot.slane %v812, %v816
        %818 = vrot.lane.b32.xlu0 %v817, 16
        %v819 = vpop.permute.xlu0 %818
        %v821 = vadd.f32 %v811, %v819
        %v822 = vxor.u32 %v821, 2147483648
        %v823 = vmul.f32 %v822, 1.442695
        %v824 = vpow.pop %v823
        %v825 = vadd.f32 %v824, 1.0
        %v826 = vrcp.pop %v825
        %v827 = vmul.f32 1.0, %v826
        %829 = vrot.lane.b32.xlu0 %v827, 112
        %v830 = vpop.permute.xlu0 %829
        %832 = vst.msk [vmem:[%s396] sm:$0xff] %vm506, %v830
        %s833 = sand.u32 %s231, 1
        %s834 = scalar_lea.sflag [#allocation4], %s833
        %s835 = sand.u32 %s231, 1
        %s836 = smul.addr %s835, 8
        %s837 = scalar_lea.vmem [#allocation7], %s836
        %s838 = sand.u32 %s259, 1
        %s839 = scalar_lea.sflag [#allocation9], %s838
        %s840 = sand.u32 %s259, 1
        %s841 = smul.addr %s840, 8
        %s842 = scalar_lea.vmem [#allocation8], %s841
        // Predicated region
        $region61: #{tpu_custom_call.1} parent=51 // pred_check
          %p843 = pneg %p241
        $region62: #{tpu_custom_call.1} parent=51 // pred_check_branch
          %845 = sbr.rel (%p843) target = $region64
        $region63: #{tpu_custom_call.1} parent=51 // pred_region
          %s847 = ssub.s32 128, 128
          %848 = vsyncadd %s834, %s847
          %s849 = sadd.s32 %s34, %s33
          %s850 = smul.addr %s849, 128
          %s851 = scalar_lea.hbm %s8, %s850
          %s853 = sshll.u32 %s837, 4
          %s854 = int_to_ptr.vmem [resolvable:$true] %s853
          %856 = dma.vmem_to_hbm [thread:$0]  %s854, 128, %s851, %s834
        $region64: #{tpu_custom_call.1} parent=51 // pred_fallthru
          _
        // Predicated region
        $region65: #{tpu_custom_call.1} parent=51 // pred_check
          %p857 = pneg %p269
        $region66: #{tpu_custom_call.1} parent=51 // pred_check_branch
          %859 = sbr.rel (%p857) target = $region68
        $region67: #{tpu_custom_call.1} parent=51 // pred_region
          %s861 = ssub.s32 128, 128
          %862 = vsyncadd %s839, %s861
          %s863 = sadd.s32 %s34, %s33
          %s864 = smul.addr %s863, 128
          %s865 = scalar_lea.hbm %s9, %s864
          %s867 = sshll.u32 %s842, 4
          %s868 = int_to_ptr.vmem [resolvable:$true] %s867
          %870 = dma.vmem_to_hbm [thread:$0]  %s868, 128, %s865, %s839
        $region68: #{tpu_custom_call.1} parent=51 // pred_fallthru
          _
      $region52: #{tpu_custom_call.1} parent=5 // pred_fallthru
        _
      %p871 = scmp.le.s32.totalorder 2, %s24
      // Predicated region
      $region69: #{tpu_custom_call.1} parent=5 // pred_check
        %p872 = pneg %p871
      $region70: #{tpu_custom_call.1} parent=5 // pred_check_branch
        %874 = sbr.rel (%p872) target = $region72
      $region71: #{tpu_custom_call.1} parent=5 // pred_region
        %s875 = ssub.s32 %s24, 2
        // Predicated region
        $region73: #{tpu_custom_call.1} parent=71 // pred_check
          %p876 = pneg %p247
        $region74: #{tpu_custom_call.1} parent=71 // pred_check_branch
          %878 = sbr.rel (%p876) target = $region76
        $region75: #{tpu_custom_call.1} parent=71 // pred_region
          %s879 = sand.u32 %s232, 1
          %s880 = scalar_lea.sflag [#allocation4], %s879
          %s881 = sand.u32 %s232, 1
          %s882 = smul.addr %s881, 8
          %s883 = scalar_lea.vmem [#allocation7], %s882
          %884 = dma.done %s880, 128
        $region76: #{tpu_custom_call.1} parent=71 // pred_fallthru
          _
        // Predicated region
        $region77: #{tpu_custom_call.1} parent=71 // pred_check
          %p885 = pneg %p275
        $region78: #{tpu_custom_call.1} parent=71 // pred_check_branch
          %887 = sbr.rel (%p885) target = $region80
        $region79: #{tpu_custom_call.1} parent=71 // pred_region
          %s888 = sand.u32 %s260, 1
          %s889 = scalar_lea.sflag [#allocation9], %s888
          %s890 = sand.u32 %s260, 1
          %s891 = smul.addr %s890, 8
          %s892 = scalar_lea.vmem [#allocation8], %s891
          %893 = dma.done %s889, 128
        $region80: #{tpu_custom_call.1} parent=71 // pred_fallthru
          _
      $region72: #{tpu_custom_call.1} parent=5 // pred_fallthru
        _
    $region6: #{tpu_custom_call.1} parent=1 // loop_footer
      %s28 = sadd.s32 1, %s24
    $region7: #{tpu_custom_call.1} parent=1 // loop_footer_branch
      %23 = sbr.rel target = $region3
    $region8: #{tpu_custom_call.1} parent=1 // loop_exit
      _
    %894 = vsyncpa [#allocation3], 1
    %s895 = scalar_lea.sflag [#allocation3], 1
    %896 = vsyncpa %s895, 1
    %897 = vsyncpa [#allocation6], 1
    %898 = vsyncpa [#allocation4], 1
    %s899 = scalar_lea.sflag [#allocation4], 1
    %900 = vsyncpa %s899, 1
    %901 = vsyncpa [#allocation9], 1
    %s902 = scalar_lea.sflag [#allocation9], 1
    %903 = vsyncpa %s902, 1

</llo_original>
